<compile_context>
chip_gen: v7x
topology: tpu7x:2x2x1
jax: 0.10.0
libtpu: 0.0.40
codegen_flags: <defaults>
</compile_context>

<pallas_src>
import jax
import jax.numpy as jnp
from jax.experimental import pallas as pl
from jax.experimental.pallas import tpu as pltpu


def _round_up(x, m):
    return ((x + m - 1) // m) * m


# ----------------------------- Pallas kernel --------------------------------
def _self_attentive_kernel(h_ref, ws1t_ref, ws2t_ref, w1t_ref, b1_ref,
                           out_ref, a_ref):
    # h_ref   : (TB, n, hidden)
    # ws1t_ref: (hidden, d_pad)    = Ws1^T, zero-padded along d
    # ws2t_ref: (d_pad, r)         = Ws2^T, zero-padded along d
    # w1t_ref : (r*hidden, o_pad)  = fc1.weight^T, zero-padded along mlp_d
    # b1_ref  : (1, o_pad)
    # out_ref : (TB, o_pad)
    # a_ref   : (TB, r, n)
    tb, n, hidden = h_ref.shape
    r = ws2t_ref.shape[1]

    h = h_ref[...]                                        # (TB, n, hidden)
    h_rows = h.reshape(tb * n, hidden)                    # (TB*n, hidden)

    # FLOP-heavy matmul, lane-dense in d (MXU, f32 accumulate).
    a_pre = jnp.tanh(
        jnp.dot(h_rows, ws1t_ref[...], preferred_element_type=jnp.float32))

    # Attention logits, then per-(batch, hop) softmax over n.
    scores = jnp.dot(a_pre, ws2t_ref[...],
                     preferred_element_type=jnp.float32)  # (TB*n, r)
    scores = jnp.transpose(scores.reshape(tb, n, r), (0, 2, 1))  # (TB, r, n)

    s_max = jnp.max(scores, axis=-1, keepdims=True)
    e = jnp.exp(scores - s_max)
    attn = e / jnp.sum(e, axis=-1, keepdims=True)         # (TB, r, n)

    # M = A @ H per batch, flatten hops, final linear + relu.
    m_ctx = jnp.einsum('brn,bnh->brh', attn, h,
                       preferred_element_type=jnp.float32)  # (TB, r, hidden)
    m_flat = m_ctx.reshape(tb, r * hidden)

    out = jnp.dot(m_flat, w1t_ref[...], preferred_element_type=jnp.float32)
    out = jnp.maximum(out + b1_ref[...], 0.0)

    out_ref[...] = out.astype(out_ref.dtype)
    a_ref[...] = attn.astype(a_ref.dtype)


# ------------------------------- wrapper -------------------------------------
def self_attentive_forward(H, Ws1, Ws2, W1, b1, *, batch_block=None):
    """
    H  : (bs, n, hidden)   float32 rnn output
    Ws1: (d, hidden)       torch self.Ws1[0]
    Ws2: (r, d)            torch self.Ws2[0]
    W1 : (mlp_d, r*hidden) torch fc1.weight
    b1 : (mlp_d,)          torch fc1.bias
    Returns: out (bs, mlp_d), A (bs, r, n)
    """
    bs, n, hidden = H.shape
    d, hidden2 = Ws1.shape
    r, d2 = Ws2.shape
    mlp_d, k_fc = W1.shape
    assert hidden2 == hidden and d2 == d and k_fc == r * hidden

    tb = bs if batch_block is None else batch_block
    assert bs % tb == 0 and (tb == bs or tb % 8 == 0)
    grid = (bs // tb,)

    # Lane-dense padding (multiples of 128) for the two lane-axis feature dims.
    d_pad = _round_up(d, 128)
    o_pad = _round_up(mlp_d, 128)

    f32 = jnp.float32
    ws1t = jnp.zeros((hidden, d_pad), f32).at[:, :d].set(Ws1.T.astype(f32))
    ws2t = jnp.zeros((d_pad, r), f32).at[:d, :].set(Ws2.T.astype(f32))
    w1t = jnp.zeros((r * hidden, o_pad), f32).at[:, :mlp_d].set(W1.T.astype(f32))
    b1p = jnp.zeros((1, o_pad), f32).at[0, :mlp_d].set(b1.astype(f32))

    out_pad, attn = pl.pallas_call(
        _self_attentive_kernel,
        out_shape=(
            jax.ShapeDtypeStruct((bs, o_pad), f32),
            jax.ShapeDtypeStruct((bs, r, n), f32),
        ),
        grid=grid,
        in_specs=[
            pl.BlockSpec((tb, n, hidden), lambda i: (i, 0, 0)),
            pl.BlockSpec((hidden, d_pad), lambda i: (0, 0)),
            pl.BlockSpec((d_pad, r), lambda i: (0, 0)),
            pl.BlockSpec((r * hidden, o_pad), lambda i: (0, 0)),
            pl.BlockSpec((1, o_pad), lambda i: (0, 0)),
        ],
        out_specs=(
            pl.BlockSpec((tb, o_pad), lambda i: (i, 0)),
            pl.BlockSpec((tb, r, n), lambda i: (i, 0, 0)),
        ),
        compiler_params=pltpu.CompilerParams(
            dimension_semantics=("parallel",)),
    )(H.astype(f32), ws1t, ws2t, w1t, b1p)

    return out_pad[:, :mlp_d], attn


# ---------------------------- pure-JAX reference ------------------------------
def _self_attentive_ref(H, Ws1, Ws2, W1, b1):
    bs, n, _ = H.shape
    a = jnp.tanh(jnp.einsum('dh,bnh->bdn', Ws1, H))
    a = jnp.einsum('rd,bdn->brn', Ws2, a)
    a = jax.nn.softmax(a, axis=-1)
    m = jnp.einsum('brn,bnh->brh', a, H)
    out = jax.nn.relu(m.reshape(bs, -1) @ W1.T + b1)
    return out, a


# --------------------------------- main --------------------------------------
if __name__ == "__main__":
    BS, N, HIDDEN, R, MLP_D = 2, 8, 32, 2, 96   # d = mlp_d, as in the module

    key = jax.random.PRNGKey(0)
    k1, k2, k3, k4, k5 = jax.random.split(key, 5)

    H = jax.random.normal(k1, (BS, N, HIDDEN), jnp.float32)
    Ws1 = 0.1 * (2.0 * jax.random.uniform(k2, (MLP_D, HIDDEN), jnp.float32) - 1.0)
    Ws2 = 0.1 * (2.0 * jax.random.uniform(k3, (R, MLP_D), jnp.float32) - 1.0)
    W1 = jax.random.normal(k4, (MLP_D, R * HIDDEN), jnp.float32) / jnp.sqrt(R * HIDDEN)
    b1 = 0.01 * jax.random.normal(k5, (MLP_D,), jnp.float32)

    out, attn = self_attentive_forward(H, Ws1, Ws2, W1, b1)
    jax.block_until_ready((out, attn))

    assert out.shape == (BS, MLP_D), out.shape
    assert attn.shape == (BS, R, N), attn.shape

    out_ref, attn_ref = _self_attentive_ref(H, Ws1, Ws2, W1, b1)
    assert jnp.allclose(out, out_ref, atol=2e-3, rtol=2e-3), \
        float(jnp.max(jnp.abs(out - out_ref)))
    assert jnp.allclose(attn, attn_ref, atol=2e-3, rtol=2e-3), \
        float(jnp.max(jnp.abs(attn - attn_ref)))

    print("KERNEL_OK")
</pallas_src>

<mosaic_0001>
module attributes {stable_mosaic.version = 11 : i64} {
  func.func @_self_attentive_kernel(%arg0: i32, %arg1: memref<2x8x32xf32, #tpu.memory_space<vmem>>, %arg2: memref<32x128xf32, #tpu.memory_space<vmem>>, %arg3: memref<128x2xf32, #tpu.memory_space<vmem>>, %arg4: memref<64x128xf32, #tpu.memory_space<vmem>>, %arg5: memref<1x128xf32, #tpu.memory_space<vmem>>, %arg6: memref<2x128xf32, #tpu.memory_space<vmem>>, %arg7: memref<2x2x8xf32, #tpu.memory_space<vmem>>) attributes {dimension_semantics = [#tpu.dimension_semantics<parallel>], iteration_bounds = array<i64: 1>, scalar_prefetch = 0 : i64, scratch_operands = 0 : i64, tpu.core_type = #tpu.core_type<tc>, window_params = [{transform_indices = @transform_0, window_bounds = array<i64: 2, 8, 32>}, {pipeline_mode = #tpu.pipeline_mode<synchronous>, transform_indices = @transform_1, window_bounds = array<i64: 32, 128>}, {pipeline_mode = #tpu.pipeline_mode<synchronous>, transform_indices = @transform_2, window_bounds = array<i64: 128, 2>}, {pipeline_mode = #tpu.pipeline_mode<synchronous>, transform_indices = @transform_3, window_bounds = array<i64: 64, 128>}, {pipeline_mode = #tpu.pipeline_mode<synchronous>, transform_indices = @transform_4, window_bounds = array<i64: 1, 128>}, {transform_indices = @transform_5, window_bounds = array<i64: 2, 128>}, {transform_indices = @transform_6, window_bounds = array<i64: 2, 2, 8>}]} {
    %c0 = arith.constant 0 : index
    %c0_0 = arith.constant 0 : index
    %c0_1 = arith.constant 0 : index
    %0 = vector.load %arg1[%c0, %c0_0, %c0_1] : memref<2x8x32xf32, #tpu.memory_space<vmem>>, vector<2x8x32xf32>
    %1 = vector.shape_cast %0 : vector<2x8x32xf32> to vector<16x32xf32>
    %c0_2 = arith.constant 0 : index
    %c0_3 = arith.constant 0 : index
    %2 = vector.load %arg2[%c0_2, %c0_3] : memref<32x128xf32, #tpu.memory_space<vmem>>, vector<32x128xf32>
    %cst = arith.constant dense<0.000000e+00> : vector<16x128xf32>
    %3 = tpu.matmul %1, %2, %cst {dimension_numbers = #tpu.dot_dimension_numbers<[1], [0], [0], [1], [0, 0, 1, 1], [], []>} : vector<16x32xf32>, vector<32x128xf32>, vector<16x128xf32> -> vector<16x128xf32>
    %4 = math.tanh %3 : vector<16x128xf32>
    %c0_4 = arith.constant 0 : index
    %c0_5 = arith.constant 0 : index
    %5 = vector.load %arg3[%c0_4, %c0_5] : memref<128x2xf32, #tpu.memory_space<vmem>>, vector<128x2xf32>
    %cst_6 = arith.constant dense<0.000000e+00> : vector<16x2xf32>
    %6 = tpu.matmul %4, %5, %cst_6 {dimension_numbers = #tpu.dot_dimension_numbers<[1], [0], [0], [1], [0, 0, 1, 1], [], []>} : vector<16x128xf32>, vector<128x2xf32>, vector<16x2xf32> -> vector<16x2xf32>
    %7 = vector.shape_cast %6 : vector<16x2xf32> to vector<2x8x2xf32>
    %8 = tpu.transpose %7, [0, 2, 1] : vector<2x8x2xf32> -> vector<2x2x8xf32>
    %cst_7 = arith.constant dense<0xFF800000> : vector<2x2xf32>
    %9 = vector.multi_reduction <maximumf>, %8, %cst_7 [2] : vector<2x2x8xf32> to vector<2x2xf32>
    %10 = vector.shape_cast %9 : vector<2x2xf32> to vector<2x2x1xf32>
    %11 = vector.broadcast %10 : vector<2x2x1xf32> to vector<2x2x8xf32>
    %12 = arith.subf %8, %11 : vector<2x2x8xf32>
    %13 = math.exp %12 : vector<2x2x8xf32>
    %cst_8 = arith.constant dense<0.000000e+00> : vector<2x2xf32>
    %14 = vector.multi_reduction <add>, %13, %cst_8 [2] : vector<2x2x8xf32> to vector<2x2xf32>
    %15 = vector.shape_cast %14 : vector<2x2xf32> to vector<2x2x1xf32>
    %16 = vector.broadcast %15 : vector<2x2x1xf32> to vector<2x2x8xf32>
    %17 = arith.divf %13, %16 : vector<2x2x8xf32>
    "tpu.trace_start"() <{level = 10 : i32, message = "brn,bnh->brh"}> : () -> ()
    %cst_9 = arith.constant dense<0.000000e+00> : vector<2x2x32xf32>
    %18 = tpu.matmul %17, %0, %cst_9 {dimension_numbers = #tpu.dot_dimension_numbers<[2], [1], [1], [2], [0, 0, 0, 1, 1, 2], [0], [0]>} : vector<2x2x8xf32>, vector<2x8x32xf32>, vector<2x2x32xf32> -> vector<2x2x32xf32>
    "tpu.trace_stop"() : () -> ()
    %19 = vector.shape_cast %18 : vector<2x2x32xf32> to vector<2x64xf32>
    %c0_10 = arith.constant 0 : index
    %c0_11 = arith.constant 0 : index
    %20 = vector.load %arg4[%c0_10, %c0_11] : memref<64x128xf32, #tpu.memory_space<vmem>>, vector<64x128xf32>
    %cst_12 = arith.constant dense<0.000000e+00> : vector<2x128xf32>
    %21 = tpu.matmul %19, %20, %cst_12 {dimension_numbers = #tpu.dot_dimension_numbers<[1], [0], [0], [1], [0, 0, 1, 1], [], []>} : vector<2x64xf32>, vector<64x128xf32>, vector<2x128xf32> -> vector<2x128xf32>
    %c0_13 = arith.constant 0 : index
    %c0_14 = arith.constant 0 : index
    %22 = vector.load %arg5[%c0_13, %c0_14] : memref<1x128xf32, #tpu.memory_space<vmem>>, vector<1x128xf32>
    %23 = vector.broadcast %22 : vector<1x128xf32> to vector<2x128xf32>
    %24 = arith.addf %21, %23 : vector<2x128xf32>
    %cst_15 = arith.constant 0.000000e+00 : f32
    %25 = vector.broadcast %cst_15 : f32 to vector<2x128xf32>
    %26 = arith.maximumf %24, %25 : vector<2x128xf32>
    %c0_16 = arith.constant 0 : index
    %c0_17 = arith.constant 0 : index
    %27 = vector.load %arg6[%c0_16, %c0_17] : memref<2x128xf32, #tpu.memory_space<vmem>>, vector<2x128xf32>
    tpu.vector_store %arg6[%c0_16, %c0_17], %26 {strides = array<i32>} : memref<2x128xf32, #tpu.memory_space<vmem>>, vector<2x128xf32>,
    %c0_18 = arith.constant 0 : index
    %c0_19 = arith.constant 0 : index
    %c0_20 = arith.constant 0 : index
    %28 = vector.load %arg7[%c0_18, %c0_19, %c0_20] : memref<2x2x8xf32, #tpu.memory_space<vmem>>, vector<2x2x8xf32>
    tpu.vector_store %arg7[%c0_18, %c0_19, %c0_20], %17 {strides = array<i32>} : memref<2x2x8xf32, #tpu.memory_space<vmem>>, vector<2x2x8xf32>,
    return
  }
  func.func @transform_0(%arg0: i32) -> (i32, i32, i32) {
    %c0_i32 = arith.constant 0 : i32
    %c0_i32_0 = arith.constant 0 : i32
    %c0_i32_1 = arith.constant 0 : i32
    return %arg0, %c0_i32, %c0_i32_0 : i32, i32, i32
  }
  func.func @transform_1(%arg0: i32) -> (i32, i32) {
    %c0_i32 = arith.constant 0 : i32
    %c0_i32_0 = arith.constant 0 : i32
    %c0_i32_1 = arith.constant 0 : i32
    return %c0_i32, %c0_i32_0 : i32, i32
  }
  func.func @transform_2(%arg0: i32) -> (i32, i32) {
    %c0_i32 = arith.constant 0 : i32
    %c0_i32_0 = arith.constant 0 : i32
    %c0_i32_1 = arith.constant 0 : i32
    return %c0_i32, %c0_i32_0 : i32, i32
  }
  func.func @transform_3(%arg0: i32) -> (i32, i32) {
    %c0_i32 = arith.constant 0 : i32
    %c0_i32_0 = arith.constant 0 : i32
    %c0_i32_1 = arith.constant 0 : i32
    return %c0_i32, %c0_i32_0 : i32, i32
  }
  func.func @transform_4(%arg0: i32) -> (i32, i32) {
    %c0_i32 = arith.constant 0 : i32
    %c0_i32_0 = arith.constant 0 : i32
    %c0_i32_1 = arith.constant 0 : i32
    return %c0_i32, %c0_i32_0 : i32, i32
  }
  func.func @transform_5(%arg0: i32) -> (i32, i32) {
    %c0_i32 = arith.constant 0 : i32
    %c0_i32_0 = arith.constant 0 : i32
    return %arg0, %c0_i32 : i32, i32
  }
  func.func @transform_6(%arg0: i32) -> (i32, i32, i32) {
    %c0_i32 = arith.constant 0 : i32
    %c0_i32_0 = arith.constant 0 : i32
    %c0_i32_1 = arith.constant 0 : i32
    return %arg0, %c0_i32, %c0_i32_0 : i32, i32, i32
  }
}

</mosaic_0001>

<llo_original>
// kernel: tpu_custom_call.1
$region0: #{tpu_custom_call.1}
  #allocation0 [shape = 'u32[]', space=smem, size = 0x4, offset = 0x4, fixed_abs, tag = 'smem constant byte address 0x4 - core index']
  #allocation1 [shape = 'u32[144,128]{1,0:T(1,128)}', space=vmem, size = 0x12000, scoped, tag = 'internal scratch']
  %s0 = inlined_call_operand.vmem [shape: f32[2,8,32], index: 0, kind: input, shape index: {}]
  %s1 = inlined_call_operand.vmem [shape: f32[32,128], index: 1, kind: input, shape index: {}]
  %s2 = inlined_call_operand.vmem [shape: f32[128,2], index: 2, kind: input, shape index: {}]
  %s3 = inlined_call_operand.vmem [shape: f32[64,128], index: 3, kind: input, shape index: {}]
  %s4 = inlined_call_operand.vmem [shape: f32[1,128], index: 4, kind: input, shape index: {}]
  %s5 = inlined_call_operand.hbm [shape: f32[2,128], index: 5, kind: output, shape index: {0}]
  %s6 = inlined_call_operand.hbm [shape: f32[2,2,8], index: 6, kind: output, shape index: {1}]
  %7 = xla_tuple %s5, %s6
  %s8 = sld [smem:[#allocation0]]
  $region38: #{tpu_custom_call.1} parent=0
    _
  %s10 = ssub.s32 1, %s8
  %s11 = scalar_select 0, %s10, %s8
  $region1: #{tpu_custom_call.1} parent=0
    #allocation2 [shape = 'u8[1024]{0}', space=vmem, size = 0x400, scoped, tag = 'output window, operand 0, single buffered']
    #allocation3 [shape = 's32[1]{0}', space=sflag, size = 0x4, scoped, tag = 'scoped memory for tpu_custom_call.1']
    #allocation4 [shape = 'u8[2048]{0}', space=vmem, size = 0x800, scoped, tag = 'output window, operand 1, single buffered']
    #allocation5 [shape = 's32[1]{0}', space=sflag, size = 0x4, scoped, tag = 'scoped memory for tpu_custom_call.1']
    %12 = vsyncpa [#allocation3], 0
    %13 = vsyncpa [#allocation5], 0
    // Predicated region
    $region2: #{tpu_custom_call.1} parent=1 // pred_check
      _
    $region3: #{tpu_custom_call.1} parent=1 // pred_check_branch
      %15 = sbr.rel (0) target = $region5
    $region4: #{tpu_custom_call.1} parent=1 // pred_region
      _
    $region5: #{tpu_custom_call.1} parent=1 // pred_fallthru
      _
    // Predicated region
    $region6: #{tpu_custom_call.1} parent=1 // pred_check
      _
    $region7: #{tpu_custom_call.1} parent=1 // pred_check_branch
      %17 = sbr.rel (0) target = $region9
    $region8: #{tpu_custom_call.1} parent=1 // pred_region
      _
    $region9: #{tpu_custom_call.1} parent=1 // pred_fallthru
      _
    // Predicated region
    $region10: #{tpu_custom_call.1} parent=1 // pred_check
      _
    $region11: #{tpu_custom_call.1} parent=1 // pred_check_branch
      %19 = sbr.rel (0) target = $region13
    $region12: #{tpu_custom_call.1} parent=1 // pred_region
      _
    $region13: #{tpu_custom_call.1} parent=1 // pred_fallthru
      _
    // Predicated region
    $region14: #{tpu_custom_call.1} parent=1 // pred_check
      _
    $region15: #{tpu_custom_call.1} parent=1 // pred_check_branch
      %21 = sbr.rel (0) target = $region17
    $region16: #{tpu_custom_call.1} parent=1 // pred_region
      _
    $region17: #{tpu_custom_call.1} parent=1 // pred_fallthru
      _
    // Predicated region
    $region18: #{tpu_custom_call.1} parent=1 // pred_check
      _
    $region19: #{tpu_custom_call.1} parent=1 // pred_check_branch
      %23 = sbr.rel (0) target = $region21
    $region20: #{tpu_custom_call.1} parent=1 // pred_region
      _
    $region21: #{tpu_custom_call.1} parent=1 // pred_fallthru
      _
    %v24 = vld [vmem:[%s0] sm:$0xff]
    %v25 = vld [vmem:[%s0 + $0x8] sm:$0xff]
    %v26 = vld [vmem:[%s1] sm:$0xff]
    %v27 = vld [vmem:[%s1 + $0x8] sm:$0xff]
    %v28 = vld [vmem:[%s1 + $0x10] sm:$0xff]
    %v29 = vld [vmem:[%s1 + $0x18] sm:$0xff]
    %vm30 = vcmask 261120
    %v32 = vsel %vm30, %v24, 0
    %v35 = vsel %vm30, %v25, 0
    %37 = vmatprep.subr.mxu0 0.0
    %38 = vmatpush1.msra.mxu0 %v26
    %39 = vmatprep.subr.mxu0 0.0
    %40 = vmatpush1.msra.mxu0 %v27
    %41 = vmatprep.subr.mxu0 0.0
    %42 = vmatpush1.msra.mxu0 %v28
    %43 = vmatprep.subr.mxu0 0.0
    %44 = vmatpush1.msra.mxu0 %v29
    %45 = vmatprep.subr.mxu0 0.0
    %46 = vmatpush1.msra.mxu0 0.0
    %47 = vmatprep.subr.mxu0 0.0
    %48 = vmatpush1.msra.mxu0 0.0
    %49 = vmatprep.subr.mxu0 0.0
    %50 = vmatpush1.msra.mxu0 0.0
    %51 = vmatprep.subr.mxu0 0.0
    %52 = vmatpush1.msra.mxu0 0.0
    %53 = vmatprep.subr.mxu0 0.0
    %54 = vmatpush1.msra.mxu0 0.0
    %55 = vmatprep.subr.mxu0 0.0
    %56 = vmatpush1.msra.mxu0 0.0
    %57 = vmatprep.subr.mxu0 0.0
    %58 = vmatpush1.msra.mxu0 0.0
    %59 = vmatprep.subr.mxu0 0.0
    %60 = vmatpush1.msra.mxu0 0.0
    %61 = vmatprep.subr.mxu0 0.0
    %62 = vmatpush1.msra.mxu0 0.0
    %63 = vmatprep.subr.mxu0 0.0
    %64 = vmatpush1.msra.mxu0 0.0
    %65 = vmatprep.subr.mxu0 0.0
    %66 = vmatpush1.msra.mxu0 0.0
    %67 = vmatprep.subr.mxu0 0.0
    %68 = vmatpush1.msra.mxu0 0.0
    %69 = vmatprep.subr.mxu0 0.0
    %70 = vmatpush1.msra.mxu0 0.0
    %71 = vmatprep.subr.mxu0 0.0
    %72 = vmatpush1.msra.mxu0 0.0
    %73 = vmatprep.subr.mxu0 0.0
    %74 = vmatpush1.msra.mxu0 0.0
    %75 = vmatprep.subr.mxu0 0.0
    %76 = vmatpush1.msra.mxu0 0.0
    %77 = vmatprep.subr.mxu0 0.0
    %78 = vmatpush1.msra.mxu0 0.0
    %79 = vmatprep.subr.mxu0 0.0
    %80 = vmatpush1.msra.mxu0 0.0
    %81 = vmatprep.subr.mxu0 0.0
    %82 = vmatpush1.msra.mxu0 0.0
    %83 = vmatprep.subr.mxu0 0.0
    %84 = vmatpush1.msra.mxu0 0.0
    %85 = vmatprep.subr.mxu0 0.0
    %86 = vmatpush1.msra.mxu0 0.0
    %87 = vmatprep.subr.mxu0 0.0
    %88 = vmatpush1.msra.mxu0 0.0
    %89 = vmatprep.subr.mxu0 0.0
    %90 = vmatpush1.msra.mxu0 0.0
    %91 = vmatprep.subr.mxu0 0.0
    %92 = vmatpush1.msra.mxu0 0.0
    %93 = vmatprep.subr.mxu0 0.0
    %94 = vmatpush1.msra.mxu0 0.0
    %95 = vmatprep.subr.mxu0 0.0
    %96 = vmatpush1.msra.mxu0 0.0
    %97 = vmatprep.subr.mxu0 0.0
    %98 = vmatpush1.msra.mxu0 0.0
    %99 = vmatprep.subr.mxu0 0.0
    %100 = vmatpush1.msra.mxu0 0.0
    %101 = vmatprep.mubr.f32.mxu0 0.0
    %102 = vmatmul.mubr.f32.gmra.mrb[0].mxu0 %v32
    %v103 = vpop.f32.mrb[0].mxu0
    %v104 = vadd.f32 0.0, %v103
    %v105 = vpop.f32.mrb[0].mxu0
    %106 = vmatprep.mubr.f32.mxu0 0.0
    %107 = vmatmul.mubr.f32.gmra.mrb[0].mxu0 %v35
    %v108 = vpop.f32.mrb[0].mxu0
    %v109 = vadd.f32 0.0, %v108
    %v110 = vpop.f32.mrb[0].mxu0
    %111 = vdwg.mxu0
    %v112 = vtanh.pop %v104
    %v113 = vtanh.pop %v109
    %v114 = vld [vmem:[%s2] sm:$0xff]
    %v115 = vld [vmem:[%s2 + $0x8] sm:$0xff]
    %v116 = vld [vmem:[%s2 + $0x10] sm:$0xff]
    %v117 = vld [vmem:[%s2 + $0x18] sm:$0xff]
    %v118 = vld [vmem:[%s2 + $0x20] sm:$0xff]
    %v119 = vld [vmem:[%s2 + $0x28] sm:$0xff]
    %v120 = vld [vmem:[%s2 + $0x30] sm:$0xff]
    %v121 = vld [vmem:[%s2 + $0x38] sm:$0xff]
    %v122 = vld [vmem:[%s2 + $0x40] sm:$0xff]
    %v123 = vld [vmem:[%s2 + $0x48] sm:$0xff]
    %v124 = vld [vmem:[%s2 + $0x50] sm:$0xff]
    %v125 = vld [vmem:[%s2 + $0x58] sm:$0xff]
    %v126 = vld [vmem:[%s2 + $0x60] sm:$0xff]
    %v127 = vld [vmem:[%s2 + $0x68] sm:$0xff]
    %v128 = vld [vmem:[%s2 + $0x70] sm:$0xff]
    %v129 = vld [vmem:[%s2 + $0x78] sm:$0xff]
    %130 = vmatprep.subr.mxu0 0.0
    %131 = vmatpush1.msra.mxu0 %v114
    %132 = vmatprep.subr.mxu0 0.0
    %133 = vmatpush1.msra.mxu0 %v115
    %134 = vmatprep.subr.mxu0 0.0
    %135 = vmatpush1.msra.mxu0 %v116
    %136 = vmatprep.subr.mxu0 0.0
    %137 = vmatpush1.msra.mxu0 %v117
    %138 = vmatprep.subr.mxu0 0.0
    %139 = vmatpush1.msra.mxu0 %v118
    %140 = vmatprep.subr.mxu0 0.0
    %141 = vmatpush1.msra.mxu0 %v119
    %142 = vmatprep.subr.mxu0 0.0
    %143 = vmatpush1.msra.mxu0 %v120
    %144 = vmatprep.subr.mxu0 0.0
    %145 = vmatpush1.msra.mxu0 %v121
    %146 = vmatprep.subr.mxu0 0.0
    %147 = vmatpush1.msra.mxu0 %v122
    %148 = vmatprep.subr.mxu0 0.0
    %149 = vmatpush1.msra.mxu0 %v123
    %150 = vmatprep.subr.mxu0 0.0
    %151 = vmatpush1.msra.mxu0 %v124
    %152 = vmatprep.subr.mxu0 0.0
    %153 = vmatpush1.msra.mxu0 %v125
    %154 = vmatprep.subr.mxu0 0.0
    %155 = vmatpush1.msra.mxu0 %v126
    %156 = vmatprep.subr.mxu0 0.0
    %157 = vmatpush1.msra.mxu0 %v127
    %158 = vmatprep.subr.mxu0 0.0
    %159 = vmatpush1.msra.mxu0 %v128
    %160 = vmatprep.subr.mxu0 0.0
    %161 = vmatpush1.msra.mxu0 %v129
    %162 = vmatprep.subr.mxu0 0.0
    %163 = vmatpush1.msra.mxu0 0.0
    %164 = vmatprep.subr.mxu0 0.0
    %165 = vmatpush1.msra.mxu0 0.0
    %166 = vmatprep.subr.mxu0 0.0
    %167 = vmatpush1.msra.mxu0 0.0
    %168 = vmatprep.subr.mxu0 0.0
    %169 = vmatpush1.msra.mxu0 0.0
    %170 = vmatprep.subr.mxu0 0.0
    %171 = vmatpush1.msra.mxu0 0.0
    %172 = vmatprep.subr.mxu0 0.0
    %173 = vmatpush1.msra.mxu0 0.0
    %174 = vmatprep.subr.mxu0 0.0
    %175 = vmatpush1.msra.mxu0 0.0
    %176 = vmatprep.subr.mxu0 0.0
    %177 = vmatpush1.msra.mxu0 0.0
    %178 = vmatprep.subr.mxu0 0.0
    %179 = vmatpush1.msra.mxu0 0.0
    %180 = vmatprep.subr.mxu0 0.0
    %181 = vmatpush1.msra.mxu0 0.0
    %182 = vmatprep.subr.mxu0 0.0
    %183 = vmatpush1.msra.mxu0 0.0
    %184 = vmatprep.subr.mxu0 0.0
    %185 = vmatpush1.msra.mxu0 0.0
    %186 = vmatprep.subr.mxu0 0.0
    %187 = vmatpush1.msra.mxu0 0.0
    %188 = vmatprep.subr.mxu0 0.0
    %189 = vmatpush1.msra.mxu0 0.0
    %190 = vmatprep.subr.mxu0 0.0
    %191 = vmatpush1.msra.mxu0 0.0
    %192 = vmatprep.subr.mxu0 0.0
    %193 = vmatpush1.msra.mxu0 0.0
    %194 = vmatprep.mubr.f32.mxu0 0.0
    %195 = vmatmul.mubr.f32.gmra.mrb[0].mxu0 %v112
    %v196 = vpop.f32.mrb[0].mxu0
    %v197 = vadd.f32 0.0, %v196
    %v198 = vpop.f32.mrb[0].mxu0
    %199 = vmatprep.mubr.f32.mxu0 0.0
    %200 = vmatmul.mubr.f32.gmra.mrb[0].mxu0 %v113
    %v201 = vpop.f32.mrb[0].mxu0
    %v202 = vadd.f32 0.0, %v201
    %v203 = vpop.f32.mrb[0].mxu0
    %204 = vdwg.mxu0
    %205 = vxpose.xlu0.b32.start [1/16] %v197, 128
    %206 = vxpose.xlu0.b32.cont [2/16] 0.0, 128
    %207 = vxpose.xlu0.b32.cont [3/16] 0.0, 128
    %208 = vxpose.xlu0.b32.cont [4/16] 0.0, 128
    %209 = vxpose.xlu0.b32.cont [5/16] 0.0, 128
    %210 = vxpose.xlu0.b32.cont [6/16] 0.0, 128
    %211 = vxpose.xlu0.b32.cont [7/16] 0.0, 128
    %212 = vxpose.xlu0.b32.cont [8/16] 0.0, 128
    %213 = vxpose.xlu0.b32.cont [9/16] 0.0, 128
    %214 = vxpose.xlu0.b32.cont [10/16] 0.0, 128
    %215 = vxpose.xlu0.b32.cont [11/16] 0.0, 128
    %216 = vxpose.xlu0.b32.cont [12/16] 0.0, 128
    %217 = vxpose.xlu0.b32.cont [13/16] 0.0, 128
    %218 = vxpose.xlu0.b32.cont [14/16] 0.0, 128
    %219 = vxpose.xlu0.b32.cont [15/16] 0.0, 128
    %220 = vxpose.xlu0.b32.end [16/16] 0.0, 128
    %v221 = vpop.trf.xlu0
    %v222 = vpop.trf.xlu0
    %v223 = vpop.trf.xlu0
    %v224 = vpop.trf.xlu0
    %v225 = vpop.trf.xlu0
    %v226 = vpop.trf.xlu0
    %v227 = vpop.trf.xlu0
    %v228 = vpop.trf.xlu0
    %v229 = vpop.trf.xlu0
    %v230 = vpop.trf.xlu0
    %v231 = vpop.trf.xlu0
    %v232 = vpop.trf.xlu0
    %v233 = vpop.trf.xlu0
    %v234 = vpop.trf.xlu0
    %v235 = vpop.trf.xlu0
    %v236 = vpop.trf.xlu0
    %237 = vxpose.xlu0.b32.start [1/16] %v202, 128
    %238 = vxpose.xlu0.b32.cont [2/16] 0.0, 128
    %239 = vxpose.xlu0.b32.cont [3/16] 0.0, 128
    %240 = vxpose.xlu0.b32.cont [4/16] 0.0, 128
    %241 = vxpose.xlu0.b32.cont [5/16] 0.0, 128
    %242 = vxpose.xlu0.b32.cont [6/16] 0.0, 128
    %243 = vxpose.xlu0.b32.cont [7/16] 0.0, 128
    %244 = vxpose.xlu0.b32.cont [8/16] 0.0, 128
    %245 = vxpose.xlu0.b32.cont [9/16] 0.0, 128
    %246 = vxpose.xlu0.b32.cont [10/16] 0.0, 128
    %247 = vxpose.xlu0.b32.cont [11/16] 0.0, 128
    %248 = vxpose.xlu0.b32.cont [12/16] 0.0, 128
    %249 = vxpose.xlu0.b32.cont [13/16] 0.0, 128
    %250 = vxpose.xlu0.b32.cont [14/16] 0.0, 128
    %251 = vxpose.xlu0.b32.cont [15/16] 0.0, 128
    %252 = vxpose.xlu0.b32.end [16/16] 0.0, 128
    %v253 = vpop.trf.xlu0
    %v254 = vpop.trf.xlu0
    %v255 = vpop.trf.xlu0
    %v256 = vpop.trf.xlu0
    %v257 = vpop.trf.xlu0
    %v258 = vpop.trf.xlu0
    %v259 = vpop.trf.xlu0
    %v260 = vpop.trf.xlu0
    %v261 = vpop.trf.xlu0
    %v262 = vpop.trf.xlu0
    %v263 = vpop.trf.xlu0
    %v264 = vpop.trf.xlu0
    %v265 = vpop.trf.xlu0
    %v266 = vpop.trf.xlu0
    %v267 = vpop.trf.xlu0
    %v268 = vpop.trf.xlu0
    %vm269 = vcmask 58368
    %v270 = vsel %vm269, %v221, -inf
    %271 = vmax.xlane.f32.xlu0 %v270
    %v272 = vpop.xlane.xlu0 %271
    %v273 = vsel %vm269, %v253, -inf
    %274 = vmax.xlane.f32.xlu0 %v273
    %v275 = vpop.xlane.xlu0 %274
    %v276 = vsub.f32 %v221, %v272
    %v277 = vsub.f32 %v253, %v275
    %v278 = vmul.f32 %v276, 1.442695
    %v279 = vpow.pop %v278
    %v280 = vmul.f32 %v277, 1.442695
    %v281 = vpow.pop %v280
    %v282 = vsel %vm269, %v279, 0.0
    %283 = vadd.xlane.f32.xlu0 %v282
    %v284 = vpop.xlane.xlu0 %283
    %v285 = vsel %vm269, %v281, 0.0
    %286 = vadd.xlane.f32.xlu0 %v285
    %v287 = vpop.xlane.xlu0 %286
    %v288 = vrcp.pop %v284
    %v289 = vmul.f32 %v279, %v288
    %v290 = vrcp.pop %v287
    %v291 = vmul.f32 %v281, %v290
    %vm292 = vcmask 64512
    %v294 = vsel %vm292, %v289, 0
    %296 = vmatprep.subr.mxu0 0.0
    %297 = vmatpush1.msra.mxu0 %v24
    %298 = vmatprep.subr.mxu0 0.0
    %299 = vmatpush1.msra.mxu0 0.0
    %300 = vmatprep.subr.mxu0 0.0
    %301 = vmatpush1.msra.mxu0 0.0
    %302 = vmatprep.subr.mxu0 0.0
    %303 = vmatpush1.msra.mxu0 0.0
    %304 = vmatprep.subr.mxu0 0.0
    %305 = vmatpush1.msra.mxu0 0.0
    %306 = vmatprep.subr.mxu0 0.0
    %307 = vmatpush1.msra.mxu0 0.0
    %308 = vmatprep.subr.mxu0 0.0
    %309 = vmatpush1.msra.mxu0 0.0
    %310 = vmatprep.subr.mxu0 0.0
    %311 = vmatpush1.msra.mxu0 0.0
    %312 = vmatprep.subr.mxu0 0.0
    %313 = vmatpush1.msra.mxu0 0.0
    %314 = vmatprep.subr.mxu0 0.0
    %315 = vmatpush1.msra.mxu0 0.0
    %316 = vmatprep.subr.mxu0 0.0
    %317 = vmatpush1.msra.mxu0 0.0
    %318 = vmatprep.subr.mxu0 0.0
    %319 = vmatpush1.msra.mxu0 0.0
    %320 = vmatprep.subr.mxu0 0.0
    %321 = vmatpush1.msra.mxu0 0.0
    %322 = vmatprep.subr.mxu0 0.0
    %323 = vmatpush1.msra.mxu0 0.0
    %324 = vmatprep.subr.mxu0 0.0
    %325 = vmatpush1.msra.mxu0 0.0
    %326 = vmatprep.subr.mxu0 0.0
    %327 = vmatpush1.msra.mxu0 0.0
    %328 = vmatprep.subr.mxu0 0.0
    %329 = vmatpush1.msra.mxu0 0.0
    %330 = vmatprep.subr.mxu0 0.0
    %331 = vmatpush1.msra.mxu0 0.0
    %332 = vmatprep.subr.mxu0 0.0
    %333 = vmatpush1.msra.mxu0 0.0
    %334 = vmatprep.subr.mxu0 0.0
    %335 = vmatpush1.msra.mxu0 0.0
    %336 = vmatprep.subr.mxu0 0.0
    %337 = vmatpush1.msra.mxu0 0.0
    %338 = vmatprep.subr.mxu0 0.0
    %339 = vmatpush1.msra.mxu0 0.0
    %340 = vmatprep.subr.mxu0 0.0
    %341 = vmatpush1.msra.mxu0 0.0
    %342 = vmatprep.subr.mxu0 0.0
    %343 = vmatpush1.msra.mxu0 0.0
    %344 = vmatprep.subr.mxu0 0.0
    %345 = vmatpush1.msra.mxu0 0.0
    %346 = vmatprep.subr.mxu0 0.0
    %347 = vmatpush1.msra.mxu0 0.0
    %348 = vmatprep.subr.mxu0 0.0
    %349 = vmatpush1.msra.mxu0 0.0
    %350 = vmatprep.subr.mxu0 0.0
    %351 = vmatpush1.msra.mxu0 0.0
    %352 = vmatprep.subr.mxu0 0.0
    %353 = vmatpush1.msra.mxu0 0.0
    %354 = vmatprep.subr.mxu0 0.0
    %355 = vmatpush1.msra.mxu0 0.0
    %356 = vmatprep.subr.mxu0 0.0
    %357 = vmatpush1.msra.mxu0 0.0
    %358 = vmatprep.subr.mxu0 0.0
    %359 = vmatpush1.msra.mxu0 0.0
    %360 = vmatprep.mubr.f32.mxu0 0.0
    %361 = vmatmul.mubr.f32.gmra.mrb[0].mxu0 %v294
    %v362 = vpop.f32.mrb[0].mxu0
    %v363 = vadd.f32 0.0, %v362
    %v364 = vpop.f32.mrb[0].mxu0
    %365 = vdwg.mxu0
    %v367 = vsel %vm292, %v291, 0
    %369 = vmatprep.subr.mxu0 0.0
    %370 = vmatpush1.msra.mxu0 %v25
    %371 = vmatprep.subr.mxu0 0.0
    %372 = vmatpush1.msra.mxu0 0.0
    %373 = vmatprep.subr.mxu0 0.0
    %374 = vmatpush1.msra.mxu0 0.0
    %375 = vmatprep.subr.mxu0 0.0
    %376 = vmatpush1.msra.mxu0 0.0
    %377 = vmatprep.subr.mxu0 0.0
    %378 = vmatpush1.msra.mxu0 0.0
    %379 = vmatprep.subr.mxu0 0.0
    %380 = vmatpush1.msra.mxu0 0.0
    %381 = vmatprep.subr.mxu0 0.0
    %382 = vmatpush1.msra.mxu0 0.0
    %383 = vmatprep.subr.mxu0 0.0
    %384 = vmatpush1.msra.mxu0 0.0
    %385 = vmatprep.subr.mxu0 0.0
    %386 = vmatpush1.msra.mxu0 0.0
    %387 = vmatprep.subr.mxu0 0.0
    %388 = vmatpush1.msra.mxu0 0.0
    %389 = vmatprep.subr.mxu0 0.0
    %390 = vmatpush1.msra.mxu0 0.0
    %391 = vmatprep.subr.mxu0 0.0
    %392 = vmatpush1.msra.mxu0 0.0
    %393 = vmatprep.subr.mxu0 0.0
    %394 = vmatpush1.msra.mxu0 0.0
    %395 = vmatprep.subr.mxu0 0.0
    %396 = vmatpush1.msra.mxu0 0.0
    %397 = vmatprep.subr.mxu0 0.0
    %398 = vmatpush1.msra.mxu0 0.0
    %399 = vmatprep.subr.mxu0 0.0
    %400 = vmatpush1.msra.mxu0 0.0
    %401 = vmatprep.subr.mxu0 0.0
    %402 = vmatpush1.msra.mxu0 0.0
    %403 = vmatprep.subr.mxu0 0.0
    %404 = vmatpush1.msra.mxu0 0.0
    %405 = vmatprep.subr.mxu0 0.0
    %406 = vmatpush1.msra.mxu0 0.0
    %407 = vmatprep.subr.mxu0 0.0
    %408 = vmatpush1.msra.mxu0 0.0
    %409 = vmatprep.subr.mxu0 0.0
    %410 = vmatpush1.msra.mxu0 0.0
    %411 = vmatprep.subr.mxu0 0.0
    %412 = vmatpush1.msra.mxu0 0.0
    %413 = vmatprep.subr.mxu0 0.0
    %414 = vmatpush1.msra.mxu0 0.0
    %415 = vmatprep.subr.mxu0 0.0
    %416 = vmatpush1.msra.mxu0 0.0
    %417 = vmatprep.subr.mxu0 0.0
    %418 = vmatpush1.msra.mxu0 0.0
    %419 = vmatprep.subr.mxu0 0.0
    %420 = vmatpush1.msra.mxu0 0.0
    %421 = vmatprep.subr.mxu0 0.0
    %422 = vmatpush1.msra.mxu0 0.0
    %423 = vmatprep.subr.mxu0 0.0
    %424 = vmatpush1.msra.mxu0 0.0
    %425 = vmatprep.subr.mxu0 0.0
    %426 = vmatpush1.msra.mxu0 0.0
    %427 = vmatprep.subr.mxu0 0.0
    %428 = vmatpush1.msra.mxu0 0.0
    %429 = vmatprep.subr.mxu0 0.0
    %430 = vmatpush1.msra.mxu0 0.0
    %431 = vmatprep.subr.mxu0 0.0
    %432 = vmatpush1.msra.mxu0 0.0
    %433 = vmatprep.mubr.f32.mxu0 0.0
    %434 = vmatmul.mubr.f32.gmra.mrb[0].mxu0 %v367
    %v435 = vpop.f32.mrb[0].mxu0
    %v436 = vadd.f32 0.0, %v435
    %v437 = vpop.f32.mrb[0].mxu0
    %438 = vdwg.mxu0
    %v439 = vcombine.low %v363, %v436
    %v441 = vunpack.c.l.s4 1934713408
    %v442 = vunpack.c.0.s8 %v441
    %v443 = vlaneseq
    %v444 = vshrl.u32 %v443, 7
    %v445 = vsub.s32 %v442, %v444
    %v446 = vrot.slane %v439, %v445
    %v447 = vcombine.high %v446, 0.0
    %449 = vrot.lane.b32.xlu0 %v447, 32
    %v450 = vpop.permute.xlu0 %449
    %v452 = vsel %vm30, %v446, %v450
    %v453 = vld [vmem:[%s3] sm:$0xff]
    %v454 = vld [vmem:[%s3 + $0x8] sm:$0xff]
    %v455 = vld [vmem:[%s3 + $0x10] sm:$0xff]
    %v456 = vld [vmem:[%s3 + $0x18] sm:$0xff]
    %v457 = vld [vmem:[%s3 + $0x20] sm:$0xff]
    %v458 = vld [vmem:[%s3 + $0x28] sm:$0xff]
    %v459 = vld [vmem:[%s3 + $0x30] sm:$0xff]
    %v460 = vld [vmem:[%s3 + $0x38] sm:$0xff]
    %v461 = vld [vmem:[%s4] sm:$0x1]
    %v463 = vlaneseq
    %v464 = vshrl.u32 %v463, 7
    %v465 = vsub.s32 0, %v464
    %v466 = vrot.slane %v461, %v465
    %vm468 = vcmask 523264
    %v470 = vsel %vm468, %v452, 0
    %472 = vmatprep.subr.mxu0 0.0
    %473 = vmatpush1.msra.mxu0 %v453
    %474 = vmatprep.subr.mxu0 0.0
    %475 = vmatpush1.msra.mxu0 %v454
    %476 = vmatprep.subr.mxu0 0.0
    %477 = vmatpush1.msra.mxu0 %v455
    %478 = vmatprep.subr.mxu0 0.0
    %479 = vmatpush1.msra.mxu0 %v456
    %480 = vmatprep.subr.mxu0 0.0
    %481 = vmatpush1.msra.mxu0 %v457
    %482 = vmatprep.subr.mxu0 0.0
    %483 = vmatpush1.msra.mxu0 %v458
    %484 = vmatprep.subr.mxu0 0.0
    %485 = vmatpush1.msra.mxu0 %v459
    %486 = vmatprep.subr.mxu0 0.0
    %487 = vmatpush1.msra.mxu0 %v460
    %488 = vmatprep.subr.mxu0 0.0
    %489 = vmatpush1.msra.mxu0 0.0
    %490 = vmatprep.subr.mxu0 0.0
    %491 = vmatpush1.msra.mxu0 0.0
    %492 = vmatprep.subr.mxu0 0.0
    %493 = vmatpush1.msra.mxu0 0.0
    %494 = vmatprep.subr.mxu0 0.0
    %495 = vmatpush1.msra.mxu0 0.0
    %496 = vmatprep.subr.mxu0 0.0
    %497 = vmatpush1.msra.mxu0 0.0
    %498 = vmatprep.subr.mxu0 0.0
    %499 = vmatpush1.msra.mxu0 0.0
    %500 = vmatprep.subr.mxu0 0.0
    %501 = vmatpush1.msra.mxu0 0.0
    %502 = vmatprep.subr.mxu0 0.0
    %503 = vmatpush1.msra.mxu0 0.0
    %504 = vmatprep.subr.mxu0 0.0
    %505 = vmatpush1.msra.mxu0 0.0
    %506 = vmatprep.subr.mxu0 0.0
    %507 = vmatpush1.msra.mxu0 0.0
    %508 = vmatprep.subr.mxu0 0.0
    %509 = vmatpush1.msra.mxu0 0.0
    %510 = vmatprep.subr.mxu0 0.0
    %511 = vmatpush1.msra.mxu0 0.0
    %512 = vmatprep.subr.mxu0 0.0
    %513 = vmatpush1.msra.mxu0 0.0
    %514 = vmatprep.subr.mxu0 0.0
    %515 = vmatpush1.msra.mxu0 0.0
    %516 = vmatprep.subr.mxu0 0.0
    %517 = vmatpush1.msra.mxu0 0.0
    %518 = vmatprep.subr.mxu0 0.0
    %519 = vmatpush1.msra.mxu0 0.0
    %520 = vmatprep.subr.mxu0 0.0
    %521 = vmatpush1.msra.mxu0 0.0
    %522 = vmatprep.subr.mxu0 0.0
    %523 = vmatpush1.msra.mxu0 0.0
    %524 = vmatprep.subr.mxu0 0.0
    %525 = vmatpush1.msra.mxu0 0.0
    %526 = vmatprep.subr.mxu0 0.0
    %527 = vmatpush1.msra.mxu0 0.0
    %528 = vmatprep.subr.mxu0 0.0
    %529 = vmatpush1.msra.mxu0 0.0
    %530 = vmatprep.subr.mxu0 0.0
    %531 = vmatpush1.msra.mxu0 0.0
    %532 = vmatprep.subr.mxu0 0.0
    %533 = vmatpush1.msra.mxu0 0.0
    %534 = vmatprep.subr.mxu0 0.0
    %535 = vmatpush1.msra.mxu0 0.0
    %536 = vmatprep.mubr.f32.mxu0 0.0
    %537 = vmatmul.mubr.f32.gmra.mrb[0].mxu0 %v470
    %v538 = vpop.f32.mrb[0].mxu0
    %v539 = vadd.f32 %v466, %v538
    %v540 = vpop.f32.mrb[0].mxu0
    %541 = vdwg.mxu0
    %v542 = vmax.f32 %v539, 0.0
    %543 = vst [vmem:[#allocation2] sm:$0x3] %v542
    %544 = vst.msk [vmem:[#allocation4] sm:$0x3] %vm269, %v289
    %545 = vst.msk [vmem:[#allocation4 + $0x2] sm:$0x3] %vm269, %v291
    // Predicated region
    $region22: #{tpu_custom_call.1} parent=1 // pred_check
      _
    $region23: #{tpu_custom_call.1} parent=1 // pred_check_branch
      %547 = sbr.rel (0) target = $region25
    $region24: #{tpu_custom_call.1} parent=1 // pred_region
      %s549 = ssub.s32 32, 32
      %550 = vsyncadd [#allocation3], %s549
      %s552 = sshll.u32 [#allocation2], 4
      %s553 = int_to_ptr.vmem [resolvable:$true] %s552
      %555 = dma.vmem_to_hbm [thread:$0]  %s553, 32, %s5, [#allocation3]
    $region25: #{tpu_custom_call.1} parent=1 // pred_fallthru
      _
    // Predicated region
    $region26: #{tpu_custom_call.1} parent=1 // pred_check
      _
    $region27: #{tpu_custom_call.1} parent=1 // pred_check_branch
      %557 = sbr.rel (0) target = $region29
    $region28: #{tpu_custom_call.1} parent=1 // pred_region
      %s559 = ssub.s32 64, 64
      %560 = vsyncadd [#allocation5], %s559
      %s561 = sshll.u32 [#allocation4], 4
      %s562 = int_to_ptr.vmem [resolvable:$true] %s561
      %567 = dma.vmem_to_hbm [thread:$0]  %s562, 64, %s6, [#allocation5], 32, 32, 2
    $region29: #{tpu_custom_call.1} parent=1 // pred_fallthru
      _
    // Predicated region
    $region30: #{tpu_custom_call.1} parent=1 // pred_check
      _
    $region31: #{tpu_custom_call.1} parent=1 // pred_check_branch
      %569 = sbr.rel (0) target = $region33
    $region32: #{tpu_custom_call.1} parent=1 // pred_region
      %570 = dma.done [#allocation3], 32
    $region33: #{tpu_custom_call.1} parent=1 // pred_fallthru
      _
    // Predicated region
    $region34: #{tpu_custom_call.1} parent=1 // pred_check
      _
    $region35: #{tpu_custom_call.1} parent=1 // pred_check_branch
      %572 = sbr.rel (0) target = $region37
    $region36: #{tpu_custom_call.1} parent=1 // pred_region
      %573 = dma.done [#allocation5], 64
    $region37: #{tpu_custom_call.1} parent=1 // pred_fallthru
      _
    %574 = vsyncpa [#allocation3], 1
    %575 = vsyncpa [#allocation5], 1

</llo_original>
